<compile_context>
chip_gen: v5e
topology: v5e:2x2
jax: 0.10.0
libtpu: 0.0.40
codegen_flags: <defaults>
</compile_context>

<pallas_src>
import functools

import numpy as np
import jax
import jax.numpy as jnp
from jax import lax
from jax.experimental import pallas as pl
from jax.experimental.pallas import tpu as pltpu

EPS = 1e-5
SUBLANE = 8  # f32 sublane tile; bottleneck width is padded up to this


def _round_up(x, m):
    return -(-x // m) * m


# ----------------------------------------------------------------------------
# Boundary masks for the 9 conv taps, precomputed host-side (jit constant).
# mask[tap, m] == 1 iff the (dy, dx) neighbour of flat position m is in-bounds
# within its own image (zero-padding semantics of conv3x3, padding=1).
# ----------------------------------------------------------------------------
@functools.lru_cache(maxsize=None)
def _conv3x3_masks(N, H, W):
    M = N * H * W
    m = np.arange(M)
    h = (m // W) % H
    w = m % W
    masks = np.ones((9, M), np.float32)
    for dy in (-1, 0, 1):
        for dx in (-1, 0, 1):
            tap = (dy + 1) * 3 + (dx + 1)
            valid = ((h + dy >= 0) & (h + dy < H) &
                     (w + dx >= 0) & (w + dx < W))
            masks[tap] = valid.astype(np.float32)
    return jnp.asarray(masks)


# ----------------------------------------------------------------------------
# Fused kernel
# ----------------------------------------------------------------------------
def _bn_train(y, gamma, beta):
    """Training-mode BatchNorm over the lane (M) axis of a [C, M] tile.

    Single pass (sum / sum-of-squares), f32, biased variance, clamped at 0
    to guard against catastrophic cancellation before +eps.
    """
    inv_m = 1.0 / y.shape[1]
    s = jnp.sum(y, axis=1, keepdims=True)        # [C, 1] lane reduce (XLU)
    sq = jnp.sum(y * y, axis=1, keepdims=True)   # [C, 1]
    mean = s * inv_m
    var = jnp.maximum(sq * inv_m - mean * mean, 0.0)
    scale = gamma * lax.rsqrt(var + EPS)         # rsqrt -> EUP slot
    shift = beta - mean * scale
    return y * scale + shift


def bottleneck_kernel(x_ref, mask_ref, w1_ref, g1_ref, b1_ref,
                      w2_ref, g2_ref, b2_ref,
                      w3_ref, g3_ref, b3_ref,
                      o_ref, col_ref, *, H, W, N):
    # x_ref:  [N, Cin, H*W]        (free reshape of NCHW)
    # mask:   [9, M]               (M = N*H*W)
    # w1:     [WP, Cin]            (WP = width padded to 8)
    # w2:     [WP, 9*WP]           (im2col-flattened 3x3 weights)
    # w3:     [Cout, WP]
    # g*/b*:  [C, 1]
    # o_ref:  [N, Cout, H*W]
    # col_ref VMEM scratch: [9*WP, M]
    HW = H * W
    M = N * HW
    WP = w1_ref.shape[0]

    # Assemble the lane-dense [Cin, M] working layout (HW % 128 == 0, so the
    # concat offsets are lane-tile aligned — cheap vreg copies, no relayout).
    x = jnp.concatenate([x_ref[n] for n in range(N)], axis=1)   # [Cin, M]

    # ---- conv1 (1x1) + bn1 + relu -------------------------------------------
    # TODO(synk): size-gate a bf16 cast of the dot inputs for v6e/v7x once
    # channel counts grow; keep preferred_element_type=f32 and BN math in f32.
    y1 = jnp.dot(w1_ref[...], x, preferred_element_type=jnp.float32)   # [WP, M]
    y1 = jnp.maximum(_bn_train(y1, g1_ref[...], b1_ref[...]), 0.0)

    # ---- conv2 (3x3, stride=1, pad=1, groups=1) via im2col + one dot --------
    # Neighbour (h+dy, w+dx) of flat index m = n*HW + h*W + w is m + dy*W + dx.
    # Each tap: one XLU lane roll (out[i] = in[i - shift] => shift = -d) and a
    # precomputed boundary mask, stored into its own 8-sublane group of the
    # im2col scratch (plain aligned stores).
    for dy in (-1, 0, 1):
        for dx in (-1, 0, 1):
            tap = (dy + 1) * 3 + (dx + 1)
            d = dy * W + dx
            if d == 0:
                patch = y1
            else:
                patch = pltpu.roll(y1, (-d) % M, axis=1)
                patch = patch * mask_ref[tap:tap + 1, :]
            col_ref[tap * WP:(tap + 1) * WP, :] = patch
    y2 = jnp.dot(w2_ref[...], col_ref[...],
                 preferred_element_type=jnp.float32)                   # [WP, M]
    y2 = jnp.maximum(_bn_train(y2, g2_ref[...], b2_ref[...]), 0.0)

    # ---- conv3 (1x1) + bn3 + residual + relu (downsample is None) -----------
    y3 = jnp.dot(w3_ref[...], y2, preferred_element_type=jnp.float32)  # [Cout, M]
    y3 = _bn_train(y3, g3_ref[...], b3_ref[...])
    out = jnp.maximum(y3 + x, 0.0)

    # Write back per image; lane offsets n*HW are multiples of 128.
    for n in range(N):
        o_ref[n] = out[:, n * HW:(n + 1) * HW]


# ----------------------------------------------------------------------------
# Wrapper: NCHW in / NCHW out (only free contiguous reshapes, no transposes)
# ----------------------------------------------------------------------------
def bottleneck_forward(x_nchw, packed):
    N, Cin, H, W = x_nchw.shape
    HW = H * W
    M = N * HW
    cout, wp = packed["w3"].shape
    assert cout == Cin, "no-downsample Bottleneck requires inplanes == planes*4"
    assert HW % 128 == 0, "this kernel assumes lane-aligned per-image slabs"

    x_r = x_nchw.reshape(N, Cin, HW)           # contiguous reshape (free)
    masks = _conv3x3_masks(N, H, W)

    vmem = pl.BlockSpec(memory_space=pltpu.MemorySpace.VMEM)
    kernel = functools.partial(bottleneck_kernel, H=H, W=W, N=N)
    out = pl.pallas_call(
        kernel,
        out_shape=jax.ShapeDtypeStruct((N, cout, HW), jnp.float32),
        in_specs=[vmem] * 11,
        out_specs=vmem,
        scratch_shapes=[pltpu.VMEM((9 * wp, M), jnp.float32)],
        # Single invocation, no grid: total live data (< 0.5 MiB) is far below
        # the scoped-VMEM default on every TPU generation.
        # TODO(synk): at production M, add a grid over M (TILE_M multiple of
        # 128, "parallel") with a two-pass BN stats accumulation so v7x's two
        # TensorCores are used, and size TILE_M against v7x's 64 MiB VMEM.
    )(x_r, masks, packed["w1"], packed["g1"], packed["b1"],
      packed["w2"], packed["g2"], packed["b2"],
      packed["w3"], packed["g3"], packed["b3"])

    return out.reshape(N, cout, H, W)          # contiguous reshape (free)


# ----------------------------------------------------------------------------
# Parameters: logical (PyTorch-style) weights + packed/padded kernel layouts
# ----------------------------------------------------------------------------
def make_params(key, inplanes, planes, groups=1, base_width=64, expansion=4):
    width = int(planes * (base_width / 64.0)) * groups
    cout = planes * expansion
    k1, k2, k3 = jax.random.split(key, 3)
    w1 = jax.random.normal(k1, (width, inplanes), jnp.float32) * 0.1   # conv1 [O, I]
    w2 = jax.random.normal(k2, (width, width, 3, 3), jnp.float32) * 0.1  # OIHW
    w3 = jax.random.normal(k3, (cout, width), jnp.float32) * 0.1       # conv3 [O, I]
    return dict(w1=w1, w2=w2, w3=w3,
                g1=jnp.ones((width,), jnp.float32), b1=jnp.zeros((width,), jnp.float32),
                g2=jnp.ones((width,), jnp.float32), b2=jnp.zeros((width,), jnp.float32),
                g3=jnp.ones((cout,), jnp.float32), b3=jnp.zeros((cout,), jnp.float32))


def pack_params(p, sublane=SUBLANE):
    """Pad the bottleneck width to the f32 sublane tile and build im2col w2."""
    width, cin = p["w1"].shape
    cout = p["w3"].shape[0]
    assert cin % sublane == 0 and cout % sublane == 0
    wp = _round_up(width, sublane)

    w1 = jnp.zeros((wp, cin), jnp.float32).at[:width, :].set(p["w1"])
    w2 = jnp.zeros((wp, 9 * wp), jnp.float32)
    for ky in range(3):
        for kx in range(3):
            tap = ky * 3 + kx
            w2 = w2.at[:width, tap * wp:tap * wp + width].set(p["w2"][:, :, ky, kx])
    w3 = jnp.zeros((cout, wp), jnp.float32).at[:, :width].set(p["w3"])

    def colvec(v, rows):
        return jnp.zeros((rows, 1), jnp.float32).at[:v.shape[0], 0].set(v)

    return dict(w1=w1, g1=colvec(p["g1"], wp), b1=colvec(p["b1"], wp),
                w2=w2, g2=colvec(p["g2"], wp), b2=colvec(p["b2"], wp),
                w3=w3, g3=colvec(p["g3"], cout), b3=colvec(p["b3"], cout))


# ----------------------------------------------------------------------------
# Pure-JAX reference (for correctness check)
# ----------------------------------------------------------------------------
def _ref_bn(y, g, b):
    mean = jnp.mean(y, axis=(0, 2, 3), keepdims=True)
    var = jnp.mean((y - mean) ** 2, axis=(0, 2, 3), keepdims=True)
    return (y - mean) / jnp.sqrt(var + EPS) * g.reshape(1, -1, 1, 1) \
        + b.reshape(1, -1, 1, 1)


def ref_forward(x_nchw, p):
    dn = ("NCHW", "OIHW", "NCHW")
    w1 = p["w1"][:, :, None, None]
    w3 = p["w3"][:, :, None, None]
    out = lax.conv_general_dilated(x_nchw, w1, (1, 1), "VALID", dimension_numbers=dn)
    out = jnp.maximum(_ref_bn(out, p["g1"], p["b1"]), 0.0)
    out = lax.conv_general_dilated(out, p["w2"], (1, 1), ((1, 1), (1, 1)),
                                   dimension_numbers=dn)
    out = jnp.maximum(_ref_bn(out, p["g2"], p["b2"]), 0.0)
    out = lax.conv_general_dilated(out, w3, (1, 1), "VALID", dimension_numbers=dn)
    out = _ref_bn(out, p["g3"], p["b3"])
    return jnp.maximum(out + x_nchw, 0.0)


if __name__ == "__main__":
    key = jax.random.PRNGKey(0)
    kx, kp = jax.random.split(key)

    inplanes, planes = 16, 4          # width=4 (padded to 8), out=16 -> valid residual
    N, H, W = 2, 16, 16
    x = jax.random.normal(kx, (N, inplanes, H, W), jnp.float32)  # NCHW, like PyTorch

    params = make_params(kp, inplanes, planes)
    packed = pack_params(params)

    fwd = jax.jit(bottleneck_forward)
    out = jax.block_until_ready(fwd(x, packed))
    ref = jax.block_until_ready(ref_forward(x, params))

    assert out.shape == (N, planes * 4, H, W)
    err = float(jnp.max(jnp.abs(out - ref)))
    assert err < 2e-3, f"mismatch vs JAX reference: {err}"
    print("KERNEL_OK")
</pallas_src>

<mosaic_0001>
module attributes {stable_mosaic.version = 11 : i64} {
  func.func @bottleneck_kernel(%arg0: memref<2x16x256xf32, #tpu.memory_space<vmem>>, %arg1: memref<9x512xf32, #tpu.memory_space<vmem>>, %arg2: memref<8x16xf32, #tpu.memory_space<vmem>>, %arg3: memref<8x1xf32, #tpu.memory_space<vmem>>, %arg4: memref<8x1xf32, #tpu.memory_space<vmem>>, %arg5: memref<8x72xf32, #tpu.memory_space<vmem>>, %arg6: memref<8x1xf32, #tpu.memory_space<vmem>>, %arg7: memref<8x1xf32, #tpu.memory_space<vmem>>, %arg8: memref<16x8xf32, #tpu.memory_space<vmem>>, %arg9: memref<16x1xf32, #tpu.memory_space<vmem>>, %arg10: memref<16x1xf32, #tpu.memory_space<vmem>>, %arg11: memref<2x16x256xf32, #tpu.memory_space<vmem>>, %arg12: memref<72x512xf32, #tpu.memory_space<vmem>>) attributes {dimension_semantics = [], scalar_prefetch = 0 : i64, scratch_operands = 1 : i64, tpu.core_type = #tpu.core_type<tc>} {
    %c0 = arith.constant 0 : index
    %c0_0 = arith.constant 0 : index
    %c0_1 = arith.constant 0 : index
    %0 = vector.load %arg0[%c0, %c0_0, %c0_1] : memref<2x16x256xf32, #tpu.memory_space<vmem>>, vector<1x16x256xf32>
    %1 = vector.shape_cast %0 : vector<1x16x256xf32> to vector<16x256xf32>
    %c1 = arith.constant 1 : index
    %c0_2 = arith.constant 0 : index
    %c0_3 = arith.constant 0 : index
    %2 = vector.load %arg0[%c1, %c0_2, %c0_3] : memref<2x16x256xf32, #tpu.memory_space<vmem>>, vector<1x16x256xf32>
    %3 = vector.shape_cast %2 : vector<1x16x256xf32> to vector<16x256xf32>
    %4 = tpu.concatenate %1, %3 in 1 : vector<16x256xf32>, vector<16x256xf32> -> vector<16x512xf32>
    %c0_4 = arith.constant 0 : index
    %c0_5 = arith.constant 0 : index
    %5 = vector.load %arg2[%c0_4, %c0_5] : memref<8x16xf32, #tpu.memory_space<vmem>>, vector<8x16xf32>
    %cst = arith.constant dense<0.000000e+00> : vector<8x512xf32>
    %6 = tpu.matmul %5, %4, %cst {dimension_numbers = #tpu.dot_dimension_numbers<[1], [0], [0], [1], [0, 0, 1, 1], [], []>} : vector<8x16xf32>, vector<16x512xf32>, vector<8x512xf32> -> vector<8x512xf32>
    %c0_6 = arith.constant 0 : index
    %c0_7 = arith.constant 0 : index
    %7 = vector.load %arg3[%c0_6, %c0_7] : memref<8x1xf32, #tpu.memory_space<vmem>>, vector<8x1xf32>
    %c0_8 = arith.constant 0 : index
    %c0_9 = arith.constant 0 : index
    %8 = vector.load %arg4[%c0_8, %c0_9] : memref<8x1xf32, #tpu.memory_space<vmem>>, vector<8x1xf32>
    %cst_10 = arith.constant dense<0.000000e+00> : vector<8xf32>
    %9 = vector.multi_reduction <add>, %6, %cst_10 [1] : vector<8x512xf32> to vector<8xf32>
    %10 = vector.shape_cast %9 : vector<8xf32> to vector<8x1xf32>
    %11 = arith.mulf %6, %6 : vector<8x512xf32>
    %cst_11 = arith.constant dense<0.000000e+00> : vector<8xf32>
    %12 = vector.multi_reduction <add>, %11, %cst_11 [1] : vector<8x512xf32> to vector<8xf32>
    %13 = vector.shape_cast %12 : vector<8xf32> to vector<8x1xf32>
    %cst_12 = arith.constant 0.001953125 : f32
    %14 = vector.broadcast %cst_12 : f32 to vector<8x1xf32>
    %15 = arith.mulf %10, %14 : vector<8x1xf32>
    %cst_13 = arith.constant 0.001953125 : f32
    %16 = vector.broadcast %cst_13 : f32 to vector<8x1xf32>
    %17 = arith.mulf %13, %16 : vector<8x1xf32>
    %18 = arith.mulf %15, %15 : vector<8x1xf32>
    %19 = arith.subf %17, %18 : vector<8x1xf32>
    %cst_14 = arith.constant 0.000000e+00 : f32
    %20 = vector.broadcast %cst_14 : f32 to vector<8x1xf32>
    %21 = arith.maximumf %19, %20 : vector<8x1xf32>
    %cst_15 = arith.constant 9.99999974E-6 : f32
    %22 = vector.broadcast %cst_15 : f32 to vector<8x1xf32>
    %23 = arith.addf %21, %22 : vector<8x1xf32>
    %24 = math.rsqrt %23 : vector<8x1xf32>
    %25 = arith.mulf %7, %24 : vector<8x1xf32>
    %26 = arith.mulf %15, %25 : vector<8x1xf32>
    %27 = arith.subf %8, %26 : vector<8x1xf32>
    %28 = vector.broadcast %25 : vector<8x1xf32> to vector<8x512xf32>
    %29 = arith.mulf %6, %28 : vector<8x512xf32>
    %30 = vector.broadcast %27 : vector<8x1xf32> to vector<8x512xf32>
    %31 = arith.addf %29, %30 : vector<8x512xf32>
    %cst_16 = arith.constant 0.000000e+00 : f32
    %32 = vector.broadcast %cst_16 : f32 to vector<8x512xf32>
    %33 = arith.maximumf %31, %32 : vector<8x512xf32>
    %c17_i32 = arith.constant 17 : i32
    %34 = tpu.dynamic_rotate %33 by %c17_i32 dim 1 : vector<8x512xf32>, i32 -> vector<8x512xf32>
    %c0_17 = arith.constant 0 : index
    %c0_18 = arith.constant 0 : index
    %35 = vector.load %arg1[%c0_17, %c0_18] : memref<9x512xf32, #tpu.memory_space<vmem>>, vector<1x512xf32>
    %36 = vector.broadcast %35 : vector<1x512xf32> to vector<8x512xf32>
    %37 = arith.mulf %34, %36 : vector<8x512xf32>
    %c0_19 = arith.constant 0 : index
    %c0_20 = arith.constant 0 : index
    %38 = vector.load %arg12[%c0_19, %c0_20] : memref<72x512xf32, #tpu.memory_space<vmem>>, vector<8x512xf32>
    tpu.vector_store %arg12[%c0_19, %c0_20], %37 {strides = array<i32>} : memref<72x512xf32, #tpu.memory_space<vmem>>, vector<8x512xf32>,
    %c16_i32 = arith.constant 16 : i32
    %39 = tpu.dynamic_rotate %33 by %c16_i32 dim 1 : vector<8x512xf32>, i32 -> vector<8x512xf32>
    %c1_21 = arith.constant 1 : index
    %c0_22 = arith.constant 0 : index
    %40 = vector.load %arg1[%c1_21, %c0_22] : memref<9x512xf32, #tpu.memory_space<vmem>>, vector<1x512xf32>
    %41 = vector.broadcast %40 : vector<1x512xf32> to vector<8x512xf32>
    %42 = arith.mulf %39, %41 : vector<8x512xf32>
    %c8 = arith.constant 8 : index
    %c0_23 = arith.constant 0 : index
    %43 = vector.load %arg12[%c8, %c0_23] : memref<72x512xf32, #tpu.memory_space<vmem>>, vector<8x512xf32>
    tpu.vector_store %arg12[%c8, %c0_23], %42 {strides = array<i32>} : memref<72x512xf32, #tpu.memory_space<vmem>>, vector<8x512xf32>,
    %c15_i32 = arith.constant 15 : i32
    %44 = tpu.dynamic_rotate %33 by %c15_i32 dim 1 : vector<8x512xf32>, i32 -> vector<8x512xf32>
    %c2 = arith.constant 2 : index
    %c0_24 = arith.constant 0 : index
    %45 = vector.load %arg1[%c2, %c0_24] : memref<9x512xf32, #tpu.memory_space<vmem>>, vector<1x512xf32>
    %46 = vector.broadcast %45 : vector<1x512xf32> to vector<8x512xf32>
    %47 = arith.mulf %44, %46 : vector<8x512xf32>
    %c16 = arith.constant 16 : index
    %c0_25 = arith.constant 0 : index
    %48 = vector.load %arg12[%c16, %c0_25] : memref<72x512xf32, #tpu.memory_space<vmem>>, vector<8x512xf32>
    tpu.vector_store %arg12[%c16, %c0_25], %47 {strides = array<i32>} : memref<72x512xf32, #tpu.memory_space<vmem>>, vector<8x512xf32>,
    %c1_i32 = arith.constant 1 : i32
    %49 = tpu.dynamic_rotate %33 by %c1_i32 dim 1 : vector<8x512xf32>, i32 -> vector<8x512xf32>
    %c3 = arith.constant 3 : index
    %c0_26 = arith.constant 0 : index
    %50 = vector.load %arg1[%c3, %c0_26] : memref<9x512xf32, #tpu.memory_space<vmem>>, vector<1x512xf32>
    %51 = vector.broadcast %50 : vector<1x512xf32> to vector<8x512xf32>
    %52 = arith.mulf %49, %51 : vector<8x512xf32>
    %c24 = arith.constant 24 : index
    %c0_27 = arith.constant 0 : index
    %53 = vector.load %arg12[%c24, %c0_27] : memref<72x512xf32, #tpu.memory_space<vmem>>, vector<8x512xf32>
    tpu.vector_store %arg12[%c24, %c0_27], %52 {strides = array<i32>} : memref<72x512xf32, #tpu.memory_space<vmem>>, vector<8x512xf32>,
    %c32 = arith.constant 32 : index
    %c0_28 = arith.constant 0 : index
    %54 = vector.load %arg12[%c32, %c0_28] : memref<72x512xf32, #tpu.memory_space<vmem>>, vector<8x512xf32>
    tpu.vector_store %arg12[%c32, %c0_28], %33 {strides = array<i32>} : memref<72x512xf32, #tpu.memory_space<vmem>>, vector<8x512xf32>,
    %c511_i32 = arith.constant 511 : i32
    %55 = tpu.dynamic_rotate %33 by %c511_i32 dim 1 : vector<8x512xf32>, i32 -> vector<8x512xf32>
    %c5 = arith.constant 5 : index
    %c0_29 = arith.constant 0 : index
    %56 = vector.load %arg1[%c5, %c0_29] : memref<9x512xf32, #tpu.memory_space<vmem>>, vector<1x512xf32>
    %57 = vector.broadcast %56 : vector<1x512xf32> to vector<8x512xf32>
    %58 = arith.mulf %55, %57 : vector<8x512xf32>
    %c40 = arith.constant 40 : index
    %c0_30 = arith.constant 0 : index
    %59 = vector.load %arg12[%c40, %c0_30] : memref<72x512xf32, #tpu.memory_space<vmem>>, vector<8x512xf32>
    tpu.vector_store %arg12[%c40, %c0_30], %58 {strides = array<i32>} : memref<72x512xf32, #tpu.memory_space<vmem>>, vector<8x512xf32>,
    %c497_i32 = arith.constant 497 : i32
    %60 = tpu.dynamic_rotate %33 by %c497_i32 dim 1 : vector<8x512xf32>, i32 -> vector<8x512xf32>
    %c6 = arith.constant 6 : index
    %c0_31 = arith.constant 0 : index
    %61 = vector.load %arg1[%c6, %c0_31] : memref<9x512xf32, #tpu.memory_space<vmem>>, vector<1x512xf32>
    %62 = vector.broadcast %61 : vector<1x512xf32> to vector<8x512xf32>
    %63 = arith.mulf %60, %62 : vector<8x512xf32>
    %c48 = arith.constant 48 : index
    %c0_32 = arith.constant 0 : index
    %64 = vector.load %arg12[%c48, %c0_32] : memref<72x512xf32, #tpu.memory_space<vmem>>, vector<8x512xf32>
    tpu.vector_store %arg12[%c48, %c0_32], %63 {strides = array<i32>} : memref<72x512xf32, #tpu.memory_space<vmem>>, vector<8x512xf32>,
    %c496_i32 = arith.constant 496 : i32
    %65 = tpu.dynamic_rotate %33 by %c496_i32 dim 1 : vector<8x512xf32>, i32 -> vector<8x512xf32>
    %c7 = arith.constant 7 : index
    %c0_33 = arith.constant 0 : index
    %66 = vector.load %arg1[%c7, %c0_33] : memref<9x512xf32, #tpu.memory_space<vmem>>, vector<1x512xf32>
    %67 = vector.broadcast %66 : vector<1x512xf32> to vector<8x512xf32>
    %68 = arith.mulf %65, %67 : vector<8x512xf32>
    %c56 = arith.constant 56 : index
    %c0_34 = arith.constant 0 : index
    %69 = vector.load %arg12[%c56, %c0_34] : memref<72x512xf32, #tpu.memory_space<vmem>>, vector<8x512xf32>
    tpu.vector_store %arg12[%c56, %c0_34], %68 {strides = array<i32>} : memref<72x512xf32, #tpu.memory_space<vmem>>, vector<8x512xf32>,
    %c495_i32 = arith.constant 495 : i32
    %70 = tpu.dynamic_rotate %33 by %c495_i32 dim 1 : vector<8x512xf32>, i32 -> vector<8x512xf32>
    %c8_35 = arith.constant 8 : index
    %c0_36 = arith.constant 0 : index
    %71 = vector.load %arg1[%c8_35, %c0_36] : memref<9x512xf32, #tpu.memory_space<vmem>>, vector<1x512xf32>
    %72 = vector.broadcast %71 : vector<1x512xf32> to vector<8x512xf32>
    %73 = arith.mulf %70, %72 : vector<8x512xf32>
    %c64 = arith.constant 64 : index
    %c0_37 = arith.constant 0 : index
    %74 = vector.load %arg12[%c64, %c0_37] : memref<72x512xf32, #tpu.memory_space<vmem>>, vector<8x512xf32>
    tpu.vector_store %arg12[%c64, %c0_37], %73 {strides = array<i32>} : memref<72x512xf32, #tpu.memory_space<vmem>>, vector<8x512xf32>,
    %c0_38 = arith.constant 0 : index
    %c0_39 = arith.constant 0 : index
    %75 = vector.load %arg5[%c0_38, %c0_39] : memref<8x72xf32, #tpu.memory_space<vmem>>, vector<8x72xf32>
    %c0_40 = arith.constant 0 : index
    %c0_41 = arith.constant 0 : index
    %76 = vector.load %arg12[%c0_40, %c0_41] : memref<72x512xf32, #tpu.memory_space<vmem>>, vector<72x512xf32>
    %cst_42 = arith.constant dense<0.000000e+00> : vector<8x512xf32>
    %77 = tpu.matmul %75, %76, %cst_42 {dimension_numbers = #tpu.dot_dimension_numbers<[1], [0], [0], [1], [0, 0, 1, 1], [], []>} : vector<8x72xf32>, vector<72x512xf32>, vector<8x512xf32> -> vector<8x512xf32>
    %c0_43 = arith.constant 0 : index
    %c0_44 = arith.constant 0 : index
    %78 = vector.load %arg6[%c0_43, %c0_44] : memref<8x1xf32, #tpu.memory_space<vmem>>, vector<8x1xf32>
    %c0_45 = arith.constant 0 : index
    %c0_46 = arith.constant 0 : index
    %79 = vector.load %arg7[%c0_45, %c0_46] : memref<8x1xf32, #tpu.memory_space<vmem>>, vector<8x1xf32>
    %cst_47 = arith.constant dense<0.000000e+00> : vector<8xf32>
    %80 = vector.multi_reduction <add>, %77, %cst_47 [1] : vector<8x512xf32> to vector<8xf32>
    %81 = vector.shape_cast %80 : vector<8xf32> to vector<8x1xf32>
    %82 = arith.mulf %77, %77 : vector<8x512xf32>
    %cst_48 = arith.constant dense<0.000000e+00> : vector<8xf32>
    %83 = vector.multi_reduction <add>, %82, %cst_48 [1] : vector<8x512xf32> to vector<8xf32>
    %84 = vector.shape_cast %83 : vector<8xf32> to vector<8x1xf32>
    %cst_49 = arith.constant 0.001953125 : f32
    %85 = vector.broadcast %cst_49 : f32 to vector<8x1xf32>
    %86 = arith.mulf %81, %85 : vector<8x1xf32>
    %cst_50 = arith.constant 0.001953125 : f32
    %87 = vector.broadcast %cst_50 : f32 to vector<8x1xf32>
    %88 = arith.mulf %84, %87 : vector<8x1xf32>
    %89 = arith.mulf %86, %86 : vector<8x1xf32>
    %90 = arith.subf %88, %89 : vector<8x1xf32>
    %cst_51 = arith.constant 0.000000e+00 : f32
    %91 = vector.broadcast %cst_51 : f32 to vector<8x1xf32>
    %92 = arith.maximumf %90, %91 : vector<8x1xf32>
    %cst_52 = arith.constant 9.99999974E-6 : f32
    %93 = vector.broadcast %cst_52 : f32 to vector<8x1xf32>
    %94 = arith.addf %92, %93 : vector<8x1xf32>
    %95 = math.rsqrt %94 : vector<8x1xf32>
    %96 = arith.mulf %78, %95 : vector<8x1xf32>
    %97 = arith.mulf %86, %96 : vector<8x1xf32>
    %98 = arith.subf %79, %97 : vector<8x1xf32>
    %99 = vector.broadcast %96 : vector<8x1xf32> to vector<8x512xf32>
    %100 = arith.mulf %77, %99 : vector<8x512xf32>
    %101 = vector.broadcast %98 : vector<8x1xf32> to vector<8x512xf32>
    %102 = arith.addf %100, %101 : vector<8x512xf32>
    %cst_53 = arith.constant 0.000000e+00 : f32
    %103 = vector.broadcast %cst_53 : f32 to vector<8x512xf32>
    %104 = arith.maximumf %102, %103 : vector<8x512xf32>
    %c0_54 = arith.constant 0 : index
    %c0_55 = arith.constant 0 : index
    %105 = vector.load %arg8[%c0_54, %c0_55] : memref<16x8xf32, #tpu.memory_space<vmem>>, vector<16x8xf32>
    %cst_56 = arith.constant dense<0.000000e+00> : vector<16x512xf32>
    %106 = tpu.matmul %105, %104, %cst_56 {dimension_numbers = #tpu.dot_dimension_numbers<[1], [0], [0], [1], [0, 0, 1, 1], [], []>} : vector<16x8xf32>, vector<8x512xf32>, vector<16x512xf32> -> vector<16x512xf32>
    %c0_57 = arith.constant 0 : index
    %c0_58 = arith.constant 0 : index
    %107 = vector.load %arg9[%c0_57, %c0_58] : memref<16x1xf32, #tpu.memory_space<vmem>>, vector<16x1xf32>
    %c0_59 = arith.constant 0 : index
    %c0_60 = arith.constant 0 : index
    %108 = vector.load %arg10[%c0_59, %c0_60] : memref<16x1xf32, #tpu.memory_space<vmem>>, vector<16x1xf32>
    %cst_61 = arith.constant dense<0.000000e+00> : vector<16xf32>
    %109 = vector.multi_reduction <add>, %106, %cst_61 [1] : vector<16x512xf32> to vector<16xf32>
    %110 = vector.shape_cast %109 : vector<16xf32> to vector<16x1xf32>
    %111 = arith.mulf %106, %106 : vector<16x512xf32>
    %cst_62 = arith.constant dense<0.000000e+00> : vector<16xf32>
    %112 = vector.multi_reduction <add>, %111, %cst_62 [1] : vector<16x512xf32> to vector<16xf32>
    %113 = vector.shape_cast %112 : vector<16xf32> to vector<16x1xf32>
    %cst_63 = arith.constant 0.001953125 : f32
    %114 = vector.broadcast %cst_63 : f32 to vector<16x1xf32>
    %115 = arith.mulf %110, %114 : vector<16x1xf32>
    %cst_64 = arith.constant 0.001953125 : f32
    %116 = vector.broadcast %cst_64 : f32 to vector<16x1xf32>
    %117 = arith.mulf %113, %116 : vector<16x1xf32>
    %118 = arith.mulf %115, %115 : vector<16x1xf32>
    %119 = arith.subf %117, %118 : vector<16x1xf32>
    %cst_65 = arith.constant 0.000000e+00 : f32
    %120 = vector.broadcast %cst_65 : f32 to vector<16x1xf32>
    %121 = arith.maximumf %119, %120 : vector<16x1xf32>
    %cst_66 = arith.constant 9.99999974E-6 : f32
    %122 = vector.broadcast %cst_66 : f32 to vector<16x1xf32>
    %123 = arith.addf %121, %122 : vector<16x1xf32>
    %124 = math.rsqrt %123 : vector<16x1xf32>
    %125 = arith.mulf %107, %124 : vector<16x1xf32>
    %126 = arith.mulf %115, %125 : vector<16x1xf32>
    %127 = arith.subf %108, %126 : vector<16x1xf32>
    %128 = vector.broadcast %125 : vector<16x1xf32> to vector<16x512xf32>
    %129 = arith.mulf %106, %128 : vector<16x512xf32>
    %130 = vector.broadcast %127 : vector<16x1xf32> to vector<16x512xf32>
    %131 = arith.addf %129, %130 : vector<16x512xf32>
    %132 = arith.addf %131, %4 : vector<16x512xf32>
    %cst_67 = arith.constant 0.000000e+00 : f32
    %133 = vector.broadcast %cst_67 : f32 to vector<16x512xf32>
    %134 = arith.maximumf %132, %133 : vector<16x512xf32>
    %135 = vector.extract_strided_slice %134 {offsets = [0, 0], sizes = [16, 256], strides = [1, 1]} : vector<16x512xf32> to vector<16x256xf32>
    %c0_68 = arith.constant 0 : index
    %c0_69 = arith.constant 0 : index
    %c0_70 = arith.constant 0 : index
    %136 = vector.load %arg11[%c0_68, %c0_69, %c0_70] : memref<2x16x256xf32, #tpu.memory_space<vmem>>, vector<1x16x256xf32>
    %137 = vector.shape_cast %136 : vector<1x16x256xf32> to vector<16x256xf32>
    %138 = vector.shape_cast %135 : vector<16x256xf32> to vector<1x16x256xf32>
    tpu.vector_store %arg11[%c0_68, %c0_69, %c0_70], %138 {strides = array<i32>} : memref<2x16x256xf32, #tpu.memory_space<vmem>>, vector<1x16x256xf32>,
    %139 = vector.extract_strided_slice %134 {offsets = [0, 256], sizes = [16, 256], strides = [1, 1]} : vector<16x512xf32> to vector<16x256xf32>
    %c1_71 = arith.constant 1 : index
    %c0_72 = arith.constant 0 : index
    %c0_73 = arith.constant 0 : index
    %140 = vector.load %arg11[%c1_71, %c0_72, %c0_73] : memref<2x16x256xf32, #tpu.memory_space<vmem>>, vector<1x16x256xf32>
    %141 = vector.shape_cast %140 : vector<1x16x256xf32> to vector<16x256xf32>
    %142 = vector.shape_cast %139 : vector<16x256xf32> to vector<1x16x256xf32>
    tpu.vector_store %arg11[%c1_71, %c0_72, %c0_73], %142 {strides = array<i32>} : memref<2x16x256xf32, #tpu.memory_space<vmem>>, vector<1x16x256xf32>,
    return
  }
}

</mosaic_0001>

<llo_original>
// kernel: bottleneck_forward.1
$region0: #{bottleneck_forward.1}
  #allocation0 [shape = 'u32[]', space=smem, size = 0x4, offset = 0x4, fixed_abs, tag = 'smem constant byte address 0x4 - core index']
  #allocation1 [shape = 'u32[72,128]{1,0:T(1,128)}', space=vmem, size = 0x9000, scoped, tag = 'internal scratch']
  #allocation2 [shape = 'f32[72,512]{1,0:T(8,128)}', space=vmem, size = 0x24000, scoped, tag = 'scratch operand']
  %s0 = inlined_call_operand.vmem [shape: f32[2,16,256], index: 0, kind: input, shape index: {}]
  %s1 = inlined_call_operand.vmem [shape: f32[9,512], index: 1, kind: input, shape index: {}]
  %s2 = inlined_call_operand.vmem [shape: f32[8,16], index: 2, kind: input, shape index: {}]
  %s3 = inlined_call_operand.vmem [shape: f32[8,1], index: 3, kind: input, shape index: {}]
  %s4 = inlined_call_operand.vmem [shape: f32[8,1], index: 4, kind: input, shape index: {}]
  %s5 = inlined_call_operand.vmem [shape: f32[8,72], index: 5, kind: input, shape index: {}]
  %s6 = inlined_call_operand.vmem [shape: f32[8,1], index: 6, kind: input, shape index: {}]
  %s7 = inlined_call_operand.vmem [shape: f32[8,1], index: 7, kind: input, shape index: {}]
  %s8 = inlined_call_operand.vmem [shape: f32[16,8], index: 8, kind: input, shape index: {}]
  %s9 = inlined_call_operand.vmem [shape: f32[16,1], index: 9, kind: input, shape index: {}]
  %s10 = inlined_call_operand.vmem [shape: f32[16,1], index: 10, kind: input, shape index: {}]
  %s11 = inlined_call_operand.vmem [shape: f32[2,16,256], index: 11, kind: output, shape index: {}]
  %s12 = sld [smem:[#allocation0]]
  $region54: #{bottleneck_forward.1} parent=0
    _
  %s14 = ssub.s32 1, %s12
  %s15 = scalar_select 0, %s14, %s12
  // Predicated region
  $region2: #{bottleneck_forward.1} parent=0 // pred_check
    _
  $region3: #{bottleneck_forward.1} parent=0 // pred_check_branch
    %17 = sbr.rel (0) target = $region5
  $region4: #{bottleneck_forward.1} parent=0 // pred_region
    _
  $region5: #{bottleneck_forward.1} parent=0 // pred_fallthru
    _
  // Predicated region
  $region6: #{bottleneck_forward.1} parent=0 // pred_check
    _
  $region7: #{bottleneck_forward.1} parent=0 // pred_check_branch
    %19 = sbr.rel (0) target = $region9
  $region8: #{bottleneck_forward.1} parent=0 // pred_region
    _
  $region9: #{bottleneck_forward.1} parent=0 // pred_fallthru
    _
  // Predicated region
  $region10: #{bottleneck_forward.1} parent=0 // pred_check
    _
  $region11: #{bottleneck_forward.1} parent=0 // pred_check_branch
    %21 = sbr.rel (0) target = $region13
  $region12: #{bottleneck_forward.1} parent=0 // pred_region
    _
  $region13: #{bottleneck_forward.1} parent=0 // pred_fallthru
    _
  // Predicated region
  $region14: #{bottleneck_forward.1} parent=0 // pred_check
    _
  $region15: #{bottleneck_forward.1} parent=0 // pred_check_branch
    %23 = sbr.rel (0) target = $region17
  $region16: #{bottleneck_forward.1} parent=0 // pred_region
    _
  $region17: #{bottleneck_forward.1} parent=0 // pred_fallthru
    _
  // Predicated region
  $region18: #{bottleneck_forward.1} parent=0 // pred_check
    _
  $region19: #{bottleneck_forward.1} parent=0 // pred_check_branch
    %25 = sbr.rel (0) target = $region21
  $region20: #{bottleneck_forward.1} parent=0 // pred_region
    _
  $region21: #{bottleneck_forward.1} parent=0 // pred_fallthru
    _
  // Predicated region
  $region22: #{bottleneck_forward.1} parent=0 // pred_check
    _
  $region23: #{bottleneck_forward.1} parent=0 // pred_check_branch
    %27 = sbr.rel (0) target = $region25
  $region24: #{bottleneck_forward.1} parent=0 // pred_region
    _
  $region25: #{bottleneck_forward.1} parent=0 // pred_fallthru
    _
  // Predicated region
  $region26: #{bottleneck_forward.1} parent=0 // pred_check
    _
  $region27: #{bottleneck_forward.1} parent=0 // pred_check_branch
    %29 = sbr.rel (0) target = $region29
  $region28: #{bottleneck_forward.1} parent=0 // pred_region
    _
  $region29: #{bottleneck_forward.1} parent=0 // pred_fallthru
    _
  // Predicated region
  $region30: #{bottleneck_forward.1} parent=0 // pred_check
    _
  $region31: #{bottleneck_forward.1} parent=0 // pred_check_branch
    %31 = sbr.rel (0) target = $region33
  $region32: #{bottleneck_forward.1} parent=0 // pred_region
    _
  $region33: #{bottleneck_forward.1} parent=0 // pred_fallthru
    _
  // Predicated region
  $region34: #{bottleneck_forward.1} parent=0 // pred_check
    _
  $region35: #{bottleneck_forward.1} parent=0 // pred_check_branch
    %33 = sbr.rel (0) target = $region37
  $region36: #{bottleneck_forward.1} parent=0 // pred_region
    _
  $region37: #{bottleneck_forward.1} parent=0 // pred_fallthru
    _
  // Predicated region
  $region38: #{bottleneck_forward.1} parent=0 // pred_check
    _
  $region39: #{bottleneck_forward.1} parent=0 // pred_check_branch
    %35 = sbr.rel (0) target = $region41
  $region40: #{bottleneck_forward.1} parent=0 // pred_region
    _
  $region41: #{bottleneck_forward.1} parent=0 // pred_fallthru
    _
  // Predicated region
  $region42: #{bottleneck_forward.1} parent=0 // pred_check
    _
  $region43: #{bottleneck_forward.1} parent=0 // pred_check_branch
    %37 = sbr.rel (0) target = $region45
  $region44: #{bottleneck_forward.1} parent=0 // pred_region
    _
  $region45: #{bottleneck_forward.1} parent=0 // pred_fallthru
    _
  %v38 = vld [vmem:[%s0] sm:$0xff]
  %v39 = vld [vmem:[%s0 + $0x8] sm:$0xff]
  %v40 = vld [vmem:[%s0 + $0x10] sm:$0xff]
  %v41 = vld [vmem:[%s0 + $0x18] sm:$0xff]
  %s42 = scalar_lea.vmem %s0, 32
  %v43 = vld [vmem:[%s42] sm:$0xff]
  %v44 = vld [vmem:[%s42 + $0x8] sm:$0xff]
  %v45 = vld [vmem:[%s42 + $0x10] sm:$0xff]
  %v46 = vld [vmem:[%s42 + $0x18] sm:$0xff]
  %v47 = vld [vmem:[%s2] sm:$0xff]
  %vm48 = vcmask 130048
  %v50 = vsel %vm48, %v47, 0
  %52 = vmatpush.msra.mxu0 0.0
  %53 = vmatpush.msra.mxu0 0.0
  %54 = vmatpush.msra.mxu0 0.0
  %55 = vmatpush.msra.mxu0 0.0
  %56 = vmatpush.msra.mxu0 0.0
  %57 = vmatpush.msra.mxu0 0.0
  %58 = vmatpush.msra.mxu0 0.0
  %59 = vmatpush.msra.mxu0 0.0
  %60 = vmatpush.msra.mxu0 0.0
  %61 = vmatpush.msra.mxu0 0.0
  %62 = vmatpush.msra.mxu0 0.0
  %63 = vmatpush.msra.mxu0 0.0
  %64 = vmatpush.msra.mxu0 0.0
  %65 = vmatpush.msra.mxu0 0.0
  %66 = vmatpush.msra.mxu0 %v40
  %67 = vmatpush.msra.mxu0 %v38
  %68 = vmatmul.f32.gmra.mxu0 %v50
  %v69 = vpop.f32.mrf.mxu0
  %v70 = vadd.f32 0.0, %v69
  %71 = vdwg.mxu0
  %72 = vmatpush.msra.mxu0 0.0
  %73 = vmatpush.msra.mxu0 0.0
  %74 = vmatpush.msra.mxu0 0.0
  %75 = vmatpush.msra.mxu0 0.0
  %76 = vmatpush.msra.mxu0 0.0
  %77 = vmatpush.msra.mxu0 0.0
  %78 = vmatpush.msra.mxu0 0.0
  %79 = vmatpush.msra.mxu0 0.0
  %80 = vmatpush.msra.mxu0 0.0
  %81 = vmatpush.msra.mxu0 0.0
  %82 = vmatpush.msra.mxu0 0.0
  %83 = vmatpush.msra.mxu0 0.0
  %84 = vmatpush.msra.mxu0 0.0
  %85 = vmatpush.msra.mxu0 0.0
  %86 = vmatpush.msra.mxu0 %v41
  %87 = vmatpush.msra.mxu0 %v39
  %88 = vmatmul.f32.gmra.mxu0 %v50
  %v89 = vpop.f32.mrf.mxu0
  %v90 = vadd.f32 0.0, %v89
  %91 = vdwg.mxu0
  %92 = vmatpush.msra.mxu0 0.0
  %93 = vmatpush.msra.mxu0 0.0
  %94 = vmatpush.msra.mxu0 0.0
  %95 = vmatpush.msra.mxu0 0.0
  %96 = vmatpush.msra.mxu0 0.0
  %97 = vmatpush.msra.mxu0 0.0
  %98 = vmatpush.msra.mxu0 0.0
  %99 = vmatpush.msra.mxu0 0.0
  %100 = vmatpush.msra.mxu0 0.0
  %101 = vmatpush.msra.mxu0 0.0
  %102 = vmatpush.msra.mxu0 0.0
  %103 = vmatpush.msra.mxu0 0.0
  %104 = vmatpush.msra.mxu0 0.0
  %105 = vmatpush.msra.mxu0 0.0
  %106 = vmatpush.msra.mxu0 %v45
  %107 = vmatpush.msra.mxu0 %v43
  %108 = vmatmul.f32.gmra.mxu0 %v50
  %v109 = vpop.f32.mrf.mxu0
  %v110 = vadd.f32 0.0, %v109
  %111 = vdwg.mxu0
  %112 = vmatpush.msra.mxu0 0.0
  %113 = vmatpush.msra.mxu0 0.0
  %114 = vmatpush.msra.mxu0 0.0
  %115 = vmatpush.msra.mxu0 0.0
  %116 = vmatpush.msra.mxu0 0.0
  %117 = vmatpush.msra.mxu0 0.0
  %118 = vmatpush.msra.mxu0 0.0
  %119 = vmatpush.msra.mxu0 0.0
  %120 = vmatpush.msra.mxu0 0.0
  %121 = vmatpush.msra.mxu0 0.0
  %122 = vmatpush.msra.mxu0 0.0
  %123 = vmatpush.msra.mxu0 0.0
  %124 = vmatpush.msra.mxu0 0.0
  %125 = vmatpush.msra.mxu0 0.0
  %126 = vmatpush.msra.mxu0 %v46
  %127 = vmatpush.msra.mxu0 %v44
  %128 = vmatmul.f32.gmra.mxu0 %v50
  %v129 = vpop.f32.mrf.mxu0
  %v130 = vadd.f32 0.0, %v129
  %131 = vdwg.mxu0
  %v132 = vld [vmem:[%s3] sm:$0xff]
  %v133 = vld [vmem:[%s4] sm:$0xff]
  %v134 = vadd.f32 %v70, %v90
  %v135 = vadd.f32 %v134, %v110
  %v136 = vadd.f32 %v135, %v130
  %137 = vadd.xlane.f32.xlu0 %v136
  %v138 = vpop.xlane.xlu0 %137
  %v139 = vmul.f32 %v70, %v70
  %v140 = vmul.f32 %v90, %v90
  %v141 = vmul.f32 %v110, %v110
  %v142 = vmul.f32 %v130, %v130
  %v143 = vadd.f32 %v139, %v140
  %v144 = vadd.f32 %v143, %v141
  %v145 = vadd.f32 %v144, %v142
  %146 = vadd.xlane.f32.xlu0 %v145
  %v147 = vpop.xlane.xlu0 %146
  %v148 = vmul.f32 %v138, 0.001953125
  %v149 = vmul.f32 %v147, 0.001953125
  %v150 = vmul.f32 %v148, %v148
  %v151 = vsub.f32 %v149, %v150
  %v152 = vmax.f32 %v151, 0.0
  %v153 = vadd.f32 %v152, 1e-05
  %v154 = vrsqrt.pop %v153
  %v155 = vmul.f32 %v154, %v153
  %v156 = vmul.f32 %v155, %v154
  %v157 = vmul.f32 0.5, %v156
  %v158 = vsub.f32 1.5, %v157
  %v159 = vmul.f32 %v154, %v158
  %vm160 = vweird.f32 %v153
  %vm161 = vweird.f32 %v154
  %vm162 = vmor %vm160, %vm161
  %v163 = vsel %vm162, %v154, %v159
  %v164 = vmul.f32 %v132, %v163
  %v165 = vmul.f32 %v148, %v164
  %v166 = vsub.f32 %v133, %v165
  %168 = vset.pattern.permute.xlu0 0
  %169 = vperm.xlu0 %168, %v164
  %v170 = vpop.permute.xlu0 %169
  %v172 = vmul.f32 %v70, %v170
  %v173 = vmul.f32 %v90, %v170
  %v174 = vmul.f32 %v110, %v170
  %v175 = vmul.f32 %v130, %v170
  %177 = vset.pattern.permute.xlu0 0
  %178 = vperm.xlu0 %177, %v166
  %v179 = vpop.permute.xlu0 %178
  %v181 = vadd.f32 %v172, %v179
  %v182 = vadd.f32 %v173, %v179
  %v183 = vadd.f32 %v174, %v179
  %v184 = vadd.f32 %v175, %v179
  %v185 = vmax.f32 %v181, 0.0
  %v186 = vmax.f32 %v182, 0.0
  %v187 = vmax.f32 %v183, 0.0
  %v188 = vmax.f32 %v184, 0.0
  %189 = vrot.lane.b32.xlu0 %v185, 17
  %v190 = vpop.permute.xlu0 %189
  %191 = vrot.lane.b32.xlu0 %v186, 17
  %v192 = vpop.permute.xlu0 %191
  %193 = vrot.lane.b32.xlu0 %v187, 17
  %v194 = vpop.permute.xlu0 %193
  %195 = vrot.lane.b32.xlu0 %v188, 17
  %v196 = vpop.permute.xlu0 %195
  %v197 = vlaneseq
  %v198 = vand.u32 %v197, 127
  %vm199 = vcmp.lt.s32.totalorder %v198, 17
  %v200 = vsel %vm199, %v194, %v196
  %v201 = vsel %vm199, %v192, %v194
  %v202 = vsel %vm199, %v190, %v192
  %v203 = vsel %vm199, %v196, %v190
  %v204 = vld [vmem:[%s1] ss:$8 sm:$0xf]
  %v206 = vperm.slane %v204, 0
  %v207 = vperm.slane %v204, 1
  %v208 = vperm.slane %v204, 2
  %v209 = vperm.slane %v204, 3
  %v214 = vmul.f32 %v203, %v206
  %v215 = vmul.f32 %v202, %v207
  %v216 = vmul.f32 %v201, %v208
  %v217 = vmul.f32 %v200, %v209
  %218 = vst [vmem:[#allocation2] sm:$0xff] %v214
  %219 = vst [vmem:[#allocation2 + $0x8] sm:$0xff] %v215
  %220 = vst [vmem:[#allocation2 + $0x10] sm:$0xff] %v216
  %221 = vst [vmem:[#allocation2 + $0x18] sm:$0xff] %v217
  %222 = vrot.lane.b32.xlu0 %v185, 16
  %v223 = vpop.permute.xlu0 %222
  %224 = vrot.lane.b32.xlu0 %v186, 16
  %v225 = vpop.permute.xlu0 %224
  %226 = vrot.lane.b32.xlu0 %v187, 16
  %v227 = vpop.permute.xlu0 %226
  %228 = vrot.lane.b32.xlu0 %v188, 16
  %v229 = vpop.permute.xlu0 %228
  %vm230 = vcmp.lt.s32.totalorder %v198, 16
  %v231 = vsel %vm230, %v227, %v229
  %v232 = vsel %vm230, %v225, %v227
  %v233 = vsel %vm230, %v223, %v225
  %v234 = vsel %vm230, %v229, %v223
  %s235 = scalar_lea.vmem %s1, 1
  %v236 = vld [vmem:[%s235] ss:$8 sm:$0xf]
  %v238 = vperm.slane %v236, 0
  %v239 = vperm.slane %v236, 1
  %v240 = vperm.slane %v236, 2
  %v241 = vperm.slane %v236, 3
  %v246 = vmul.f32 %v234, %v238
  %v247 = vmul.f32 %v233, %v239
  %v248 = vmul.f32 %v232, %v240
  %v249 = vmul.f32 %v231, %v241
  %250 = vst [vmem:[#allocation2 + $0x20] sm:$0xff] %v246
  %251 = vst [vmem:[#allocation2 + $0x28] sm:$0xff] %v247
  %252 = vst [vmem:[#allocation2 + $0x30] sm:$0xff] %v248
  %253 = vst [vmem:[#allocation2 + $0x38] sm:$0xff] %v249
  %254 = vrot.lane.b32.xlu0 %v185, 15
  %v255 = vpop.permute.xlu0 %254
  %256 = vrot.lane.b32.xlu0 %v186, 15
  %v257 = vpop.permute.xlu0 %256
  %258 = vrot.lane.b32.xlu0 %v187, 15
  %v259 = vpop.permute.xlu0 %258
  %260 = vrot.lane.b32.xlu0 %v188, 15
  %v261 = vpop.permute.xlu0 %260
  %vm262 = vcmp.lt.s32.totalorder %v198, 15
  %v263 = vsel %vm262, %v259, %v261
  %v264 = vsel %vm262, %v257, %v259
  %v265 = vsel %vm262, %v255, %v257
  %v266 = vsel %vm262, %v261, %v255
  %s267 = scalar_lea.vmem %s1, 2
  %v268 = vld [vmem:[%s267] ss:$8 sm:$0xf]
  %v270 = vperm.slane %v268, 0
  %v271 = vperm.slane %v268, 1
  %v272 = vperm.slane %v268, 2
  %v273 = vperm.slane %v268, 3
  %v278 = vmul.f32 %v266, %v270
  %v279 = vmul.f32 %v265, %v271
  %v280 = vmul.f32 %v264, %v272
  %v281 = vmul.f32 %v263, %v273
  %282 = vst [vmem:[#allocation2 + $0x40] sm:$0xff] %v278
  %283 = vst [vmem:[#allocation2 + $0x48] sm:$0xff] %v279
  %284 = vst [vmem:[#allocation2 + $0x50] sm:$0xff] %v280
  %285 = vst [vmem:[#allocation2 + $0x58] sm:$0xff] %v281
  %286 = vrot.lane.b32.xlu0 %v185, 1
  %v287 = vpop.permute.xlu0 %286
  %288 = vrot.lane.b32.xlu0 %v186, 1
  %v289 = vpop.permute.xlu0 %288
  %290 = vrot.lane.b32.xlu0 %v187, 1
  %v291 = vpop.permute.xlu0 %290
  %292 = vrot.lane.b32.xlu0 %v188, 1
  %v293 = vpop.permute.xlu0 %292
  %vm294 = vcmp.lt.s32.totalorder %v198, 1
  %v295 = vsel %vm294, %v291, %v293
  %v296 = vsel %vm294, %v289, %v291
  %v297 = vsel %vm294, %v287, %v289
  %v298 = vsel %vm294, %v293, %v287
  %s299 = scalar_lea.vmem %s1, 3
  %v300 = vld [vmem:[%s299] ss:$8 sm:$0xf]
  %v302 = vperm.slane %v300, 0
  %v303 = vperm.slane %v300, 1
  %v304 = vperm.slane %v300, 2
  %v305 = vperm.slane %v300, 3
  %v310 = vmul.f32 %v298, %v302
  %v311 = vmul.f32 %v297, %v303
  %v312 = vmul.f32 %v296, %v304
  %v313 = vmul.f32 %v295, %v305
  %314 = vst [vmem:[#allocation2 + $0x60] sm:$0xff] %v310
  %315 = vst [vmem:[#allocation2 + $0x68] sm:$0xff] %v311
  %316 = vst [vmem:[#allocation2 + $0x70] sm:$0xff] %v312
  %317 = vst [vmem:[#allocation2 + $0x78] sm:$0xff] %v313
  %318 = vst [vmem:[#allocation2 + $0x80] sm:$0xff] %v185
  %319 = vst [vmem:[#allocation2 + $0x88] sm:$0xff] %v186
  %320 = vst [vmem:[#allocation2 + $0x90] sm:$0xff] %v187
  %321 = vst [vmem:[#allocation2 + $0x98] sm:$0xff] %v188
  %322 = vrot.lane.b32.xlu0 %v185, 127
  %v323 = vpop.permute.xlu0 %322
  %324 = vrot.lane.b32.xlu0 %v186, 127
  %v325 = vpop.permute.xlu0 %324
  %326 = vrot.lane.b32.xlu0 %v187, 127
  %v327 = vpop.permute.xlu0 %326
  %328 = vrot.lane.b32.xlu0 %v188, 127
  %v329 = vpop.permute.xlu0 %328
  %vm330 = vcmp.lt.s32.totalorder %v198, 127
  %v331 = vsel %vm330, %v327, %v329
  %v332 = vsel %vm330, %v325, %v327
  %v333 = vsel %vm330, %v323, %v325
  %v334 = vsel %vm330, %v329, %v323
  %s335 = scalar_lea.vmem %s1, 5
  %v336 = vld [vmem:[%s335] ss:$8 sm:$0xf]
  %v338 = vperm.slane %v336, 0
  %v339 = vperm.slane %v336, 1
  %v340 = vperm.slane %v336, 2
  %v341 = vperm.slane %v336, 3
  %v346 = vmul.f32 %v333, %v338
  %v347 = vmul.f32 %v332, %v339
  %v348 = vmul.f32 %v331, %v340
  %v349 = vmul.f32 %v334, %v341
  %350 = vst [vmem:[#allocation2 + $0xa0] sm:$0xff] %v346
  %351 = vst [vmem:[#allocation2 + $0xa8] sm:$0xff] %v347
  %352 = vst [vmem:[#allocation2 + $0xb0] sm:$0xff] %v348
  %353 = vst [vmem:[#allocation2 + $0xb8] sm:$0xff] %v349
  %354 = vrot.lane.b32.xlu0 %v185, 113
  %v355 = vpop.permute.xlu0 %354
  %356 = vrot.lane.b32.xlu0 %v186, 113
  %v357 = vpop.permute.xlu0 %356
  %358 = vrot.lane.b32.xlu0 %v187, 113
  %v359 = vpop.permute.xlu0 %358
  %360 = vrot.lane.b32.xlu0 %v188, 113
  %v361 = vpop.permute.xlu0 %360
  %vm362 = vcmp.lt.s32.totalorder %v198, 113
  %v363 = vsel %vm362, %v359, %v361
  %v364 = vsel %vm362, %v357, %v359
  %v365 = vsel %vm362, %v355, %v357
  %v366 = vsel %vm362, %v361, %v355
  %s367 = scalar_lea.vmem %s1, 6
  %v368 = vld [vmem:[%s367] ss:$8 sm:$0xf]
  %v370 = vperm.slane %v368, 0
  %v371 = vperm.slane %v368, 1
  %v372 = vperm.slane %v368, 2
  %v373 = vperm.slane %v368, 3
  %v378 = vmul.f32 %v365, %v370
  %v379 = vmul.f32 %v364, %v371
  %v380 = vmul.f32 %v363, %v372
  %v381 = vmul.f32 %v366, %v373
  %382 = vst [vmem:[#allocation2 + $0xc0] sm:$0xff] %v378
  %383 = vst [vmem:[#allocation2 + $0xc8] sm:$0xff] %v379
  %384 = vst [vmem:[#allocation2 + $0xd0] sm:$0xff] %v380
  %385 = vst [vmem:[#allocation2 + $0xd8] sm:$0xff] %v381
  %386 = vrot.lane.b32.xlu0 %v185, 112
  %v387 = vpop.permute.xlu0 %386
  %388 = vrot.lane.b32.xlu0 %v186, 112
  %v389 = vpop.permute.xlu0 %388
  %390 = vrot.lane.b32.xlu0 %v187, 112
  %v391 = vpop.permute.xlu0 %390
  %392 = vrot.lane.b32.xlu0 %v188, 112
  %v393 = vpop.permute.xlu0 %392
  %vm394 = vcmp.lt.s32.totalorder %v198, 112
  %v395 = vsel %vm394, %v391, %v393
  %v396 = vsel %vm394, %v389, %v391
  %v397 = vsel %vm394, %v387, %v389
  %v398 = vsel %vm394, %v393, %v387
  %s399 = scalar_lea.vmem %s1, 7
  %v400 = vld [vmem:[%s399] ss:$8 sm:$0xf]
  %v402 = vperm.slane %v400, 0
  %v403 = vperm.slane %v400, 1
  %v404 = vperm.slane %v400, 2
  %v405 = vperm.slane %v400, 3
  %v410 = vmul.f32 %v397, %v402
  %v411 = vmul.f32 %v396, %v403
  %v412 = vmul.f32 %v395, %v404
  %v413 = vmul.f32 %v398, %v405
  %414 = vst [vmem:[#allocation2 + $0xe0] sm:$0xff] %v410
  %415 = vst [vmem:[#allocation2 + $0xe8] sm:$0xff] %v411
  %416 = vst [vmem:[#allocation2 + $0xf0] sm:$0xff] %v412
  %417 = vst [vmem:[#allocation2 + $0xf8] sm:$0xff] %v413
  %418 = vrot.lane.b32.xlu0 %v185, 111
  %v419 = vpop.permute.xlu0 %418
  %420 = vrot.lane.b32.xlu0 %v186, 111
  %v421 = vpop.permute.xlu0 %420
  %422 = vrot.lane.b32.xlu0 %v187, 111
  %v423 = vpop.permute.xlu0 %422
  %424 = vrot.lane.b32.xlu0 %v188, 111
  %v425 = vpop.permute.xlu0 %424
  %vm426 = vcmp.lt.s32.totalorder %v198, 111
  %v427 = vsel %vm426, %v423, %v425
  %v428 = vsel %vm426, %v421, %v423
  %v429 = vsel %vm426, %v419, %v421
  %v430 = vsel %vm426, %v425, %v419
  %s431 = scalar_lea.vmem %s1, 32
  %v432 = vld [vmem:[%s431] ss:$8 sm:$0xf]
  %v434 = vperm.slane %v432, 0
  %v435 = vperm.slane %v432, 1
  %v436 = vperm.slane %v432, 2
  %v437 = vperm.slane %v432, 3
  %v442 = vmul.f32 %v429, %v434
  %v443 = vmul.f32 %v428, %v435
  %v444 = vmul.f32 %v427, %v436
  %v445 = vmul.f32 %v430, %v437
  %446 = vst [vmem:[#allocation2 + $0x100] sm:$0xff] %v442
  %447 = vst [vmem:[#allocation2 + $0x108] sm:$0xff] %v443
  %448 = vst [vmem:[#allocation2 + $0x110] sm:$0xff] %v444
  %449 = vst [vmem:[#allocation2 + $0x118] sm:$0xff] %v445
  %v450 = vld [vmem:[%s5] sm:$0xff]
  %v451 = vld [vmem:[#allocation2] sm:$0xff]
  %v452 = vld [vmem:[#allocation2 + $0x8] sm:$0xff]
  %v453 = vld [vmem:[#allocation2 + $0x10] sm:$0xff]
  %v454 = vld [vmem:[#allocation2 + $0x18] sm:$0xff]
  %v455 = vld [vmem:[#allocation2 + $0x20] sm:$0xff]
  %v456 = vld [vmem:[#allocation2 + $0x28] sm:$0xff]
  %v457 = vld [vmem:[#allocation2 + $0x30] sm:$0xff]
  %v458 = vld [vmem:[#allocation2 + $0x38] sm:$0xff]
  %v459 = vld [vmem:[#allocation2 + $0x40] sm:$0xff]
  %v460 = vld [vmem:[#allocation2 + $0x48] sm:$0xff]
  %v461 = vld [vmem:[#allocation2 + $0x50] sm:$0xff]
  %v462 = vld [vmem:[#allocation2 + $0x58] sm:$0xff]
  %v463 = vld [vmem:[#allocation2 + $0x60] sm:$0xff]
  %v464 = vld [vmem:[#allocation2 + $0x68] sm:$0xff]
  %v465 = vld [vmem:[#allocation2 + $0x70] sm:$0xff]
  %v466 = vld [vmem:[#allocation2 + $0x78] sm:$0xff]
  %v467 = vld [vmem:[#allocation2 + $0x80] sm:$0xff]
  %v468 = vld [vmem:[#allocation2 + $0x88] sm:$0xff]
  %v469 = vld [vmem:[#allocation2 + $0x90] sm:$0xff]
  %v470 = vld [vmem:[#allocation2 + $0x98] sm:$0xff]
  %v471 = vld [vmem:[#allocation2 + $0xa0] sm:$0xff]
  %v472 = vld [vmem:[#allocation2 + $0xa8] sm:$0xff]
  %v473 = vld [vmem:[#allocation2 + $0xb0] sm:$0xff]
  %v474 = vld [vmem:[#allocation2 + $0xb8] sm:$0xff]
  %v475 = vld [vmem:[#allocation2 + $0xc0] sm:$0xff]
  %v476 = vld [vmem:[#allocation2 + $0xc8] sm:$0xff]
  %v477 = vld [vmem:[#allocation2 + $0xd0] sm:$0xff]
  %v478 = vld [vmem:[#allocation2 + $0xd8] sm:$0xff]
  %v479 = vld [vmem:[#allocation2 + $0xe0] sm:$0xff]
  %v480 = vld [vmem:[#allocation2 + $0xe8] sm:$0xff]
  %v481 = vld [vmem:[#allocation2 + $0xf0] sm:$0xff]
  %v482 = vld [vmem:[#allocation2 + $0xf8] sm:$0xff]
  %v483 = vld [vmem:[#allocation2 + $0x100] sm:$0xff]
  %v484 = vld [vmem:[#allocation2 + $0x108] sm:$0xff]
  %v485 = vld [vmem:[#allocation2 + $0x110] sm:$0xff]
  %v486 = vld [vmem:[#allocation2 + $0x118] sm:$0xff]
  %vm487 = vcmask 588800
  %v489 = vsel %vm487, %v450, 0
  %491 = vmatpush.msra.mxu0 0.0
  %492 = vmatpush.msra.mxu0 0.0
  %493 = vmatpush.msra.mxu0 0.0
  %494 = vmatpush.msra.mxu0 0.0
  %495 = vmatpush.msra.mxu0 0.0
  %496 = vmatpush.msra.mxu0 0.0
  %497 = vmatpush.msra.mxu0 0.0
  %498 = vmatpush.msra.mxu0 %v483
  %499 = vmatpush.msra.mxu0 %v479
  %500 = vmatpush.msra.mxu0 %v475
  %501 = vmatpush.msra.mxu0 %v471
  %502 = vmatpush.msra.mxu0 %v467
  %503 = vmatpush.msra.mxu0 %v463
  %504 = vmatpush.msra.mxu0 %v459
  %505 = vmatpush.msra.mxu0 %v455
  %506 = vmatpush.msra.mxu0 %v451
  %507 = vmatmul.f32.gmra.mxu0 %v489
  %v508 = vpop.f32.mrf.mxu0
  %v509 = vadd.f32 0.0, %v508
  %510 = vdwg.mxu0
  %511 = vmatpush.msra.mxu0 0.0
  %512 = vmatpush.msra.mxu0 0.0
  %513 = vmatpush.msra.mxu0 0.0
  %514 = vmatpush.msra.mxu0 0.0
  %515 = vmatpush.msra.mxu0 0.0
  %516 = vmatpush.msra.mxu0 0.0
  %517 = vmatpush.msra.mxu0 0.0
  %518 = vmatpush.msra.mxu0 %v484
  %519 = vmatpush.msra.mxu0 %v480
  %520 = vmatpush.msra.mxu0 %v476
  %521 = vmatpush.msra.mxu0 %v472
  %522 = vmatpush.msra.mxu0 %v468
  %523 = vmatpush.msra.mxu0 %v464
  %524 = vmatpush.msra.mxu0 %v460
  %525 = vmatpush.msra.mxu0 %v456
  %526 = vmatpush.msra.mxu0 %v452
  %527 = vmatmul.f32.gmra.mxu0 %v489
  %v528 = vpop.f32.mrf.mxu0
  %v529 = vadd.f32 0.0, %v528
  %530 = vdwg.mxu0
  %531 = vmatpush.msra.mxu0 0.0
  %532 = vmatpush.msra.mxu0 0.0
  %533 = vmatpush.msra.mxu0 0.0
  %534 = vmatpush.msra.mxu0 0.0
  %535 = vmatpush.msra.mxu0 0.0
  %536 = vmatpush.msra.mxu0 0.0
  %537 = vmatpush.msra.mxu0 0.0
  %538 = vmatpush.msra.mxu0 %v485
  %539 = vmatpush.msra.mxu0 %v481
  %540 = vmatpush.msra.mxu0 %v477
  %541 = vmatpush.msra.mxu0 %v473
  %542 = vmatpush.msra.mxu0 %v469
  %543 = vmatpush.msra.mxu0 %v465
  %544 = vmatpush.msra.mxu0 %v461
  %545 = vmatpush.msra.mxu0 %v457
  %546 = vmatpush.msra.mxu0 %v453
  %547 = vmatmul.f32.gmra.mxu0 %v489
  %v548 = vpop.f32.mrf.mxu0
  %v549 = vadd.f32 0.0, %v548
  %550 = vdwg.mxu0
  %551 = vmatpush.msra.mxu0 0.0
  %552 = vmatpush.msra.mxu0 0.0
  %553 = vmatpush.msra.mxu0 0.0
  %554 = vmatpush.msra.mxu0 0.0
  %555 = vmatpush.msra.mxu0 0.0
  %556 = vmatpush.msra.mxu0 0.0
  %557 = vmatpush.msra.mxu0 0.0
  %558 = vmatpush.msra.mxu0 %v486
  %559 = vmatpush.msra.mxu0 %v482
  %560 = vmatpush.msra.mxu0 %v478
  %561 = vmatpush.msra.mxu0 %v474
  %562 = vmatpush.msra.mxu0 %v470
  %563 = vmatpush.msra.mxu0 %v466
  %564 = vmatpush.msra.mxu0 %v462
  %565 = vmatpush.msra.mxu0 %v458
  %566 = vmatpush.msra.mxu0 %v454
  %567 = vmatmul.f32.gmra.mxu0 %v489
  %v568 = vpop.f32.mrf.mxu0
  %v569 = vadd.f32 0.0, %v568
  %570 = vdwg.mxu0
  %v571 = vld [vmem:[%s6] sm:$0xff]
  %v572 = vld [vmem:[%s7] sm:$0xff]
  %v573 = vadd.f32 %v509, %v529
  %v574 = vadd.f32 %v573, %v549
  %v575 = vadd.f32 %v574, %v569
  %576 = vadd.xlane.f32.xlu0 %v575
  %v577 = vpop.xlane.xlu0 %576
  %v578 = vmul.f32 %v509, %v509
  %v579 = vmul.f32 %v529, %v529
  %v580 = vmul.f32 %v549, %v549
  %v581 = vmul.f32 %v569, %v569
  %v582 = vadd.f32 %v578, %v579
  %v583 = vadd.f32 %v582, %v580
  %v584 = vadd.f32 %v583, %v581
  %585 = vadd.xlane.f32.xlu0 %v584
  %v586 = vpop.xlane.xlu0 %585
  %v587 = vmul.f32 %v577, 0.001953125
  %v588 = vmul.f32 %v586, 0.001953125
  %v589 = vmul.f32 %v587, %v587
  %v590 = vsub.f32 %v588, %v589
  %v591 = vmax.f32 %v590, 0.0
  %v592 = vadd.f32 %v591, 1e-05
  %v593 = vrsqrt.pop %v592
  %v594 = vmul.f32 %v593, %v592
  %v595 = vmul.f32 %v594, %v593
  %v596 = vmul.f32 0.5, %v595
  %v597 = vsub.f32 1.5, %v596
  %v598 = vmul.f32 %v593, %v597
  %vm599 = vweird.f32 %v592
  %vm600 = vweird.f32 %v593
  %vm601 = vmor %vm599, %vm600
  %v602 = vsel %vm601, %v593, %v598
  %v603 = vmul.f32 %v571, %v602
  %v604 = vmul.f32 %v587, %v603
  %v605 = vsub.f32 %v572, %v604
  %607 = vset.pattern.permute.xlu0 0
  %608 = vperm.xlu0 %607, %v603
  %v609 = vpop.permute.xlu0 %608
  %v611 = vmul.f32 %v509, %v609
  %v612 = vmul.f32 %v529, %v609
  %v613 = vmul.f32 %v549, %v609
  %v614 = vmul.f32 %v569, %v609
  %616 = vset.pattern.permute.xlu0 0
  %617 = vperm.xlu0 %616, %v605
  %v618 = vpop.permute.xlu0 %617
  %v620 = vadd.f32 %v611, %v618
  %v621 = vadd.f32 %v612, %v618
  %v622 = vadd.f32 %v613, %v618
  %v623 = vadd.f32 %v614, %v618
  %v624 = vmax.f32 %v620, 0.0
  %v625 = vmax.f32 %v621, 0.0
  %v626 = vmax.f32 %v622, 0.0
  %v627 = vmax.f32 %v623, 0.0
  %v628 = vld [vmem:[%s8] sm:$0xff]
  %v629 = vld [vmem:[%s8 + $0x8] sm:$0xff]
  %vm630 = vcmask 64512
  %v632 = vsel %vm630, %v628, 0
  %v635 = vsel %vm630, %v629, 0
  %637 = vmatpush.msra.mxu0 0.0
  %638 = vmatpush.msra.mxu0 0.0
  %639 = vmatpush.msra.mxu0 0.0
  %640 = vmatpush.msra.mxu0 0.0
  %641 = vmatpush.msra.mxu0 0.0
  %642 = vmatpush.msra.mxu0 0.0
  %643 = vmatpush.msra.mxu0 0.0
  %644 = vmatpush.msra.mxu0 0.0
  %645 = vmatpush.msra.mxu0 0.0
  %646 = vmatpush.msra.mxu0 0.0
  %647 = vmatpush.msra.mxu0 0.0
  %648 = vmatpush.msra.mxu0 0.0
  %649 = vmatpush.msra.mxu0 0.0
  %650 = vmatpush.msra.mxu0 0.0
  %651 = vmatpush.msra.mxu0 0.0
  %652 = vmatpush.msra.mxu0 %v624
  %653 = vmatmul.f32.gmra.mxu0 %v632
  %v654 = vpop.f32.mrf.mxu0
  %v655 = vadd.f32 0.0, %v654
  %656 = vmatmul.f32.gmra.mxu0 %v635
  %v657 = vpop.f32.mrf.mxu0
  %v658 = vadd.f32 0.0, %v657
  %659 = vdwg.mxu0
  %660 = vmatpush.msra.mxu0 0.0
  %661 = vmatpush.msra.mxu0 0.0
  %662 = vmatpush.msra.mxu0 0.0
  %663 = vmatpush.msra.mxu0 0.0
  %664 = vmatpush.msra.mxu0 0.0
  %665 = vmatpush.msra.mxu0 0.0
  %666 = vmatpush.msra.mxu0 0.0
  %667 = vmatpush.msra.mxu0 0.0
  %668 = vmatpush.msra.mxu0 0.0
  %669 = vmatpush.msra.mxu0 0.0
  %670 = vmatpush.msra.mxu0 0.0
  %671 = vmatpush.msra.mxu0 0.0
  %672 = vmatpush.msra.mxu0 0.0
  %673 = vmatpush.msra.mxu0 0.0
  %674 = vmatpush.msra.mxu0 0.0
  %675 = vmatpush.msra.mxu0 %v625
  %676 = vmatmul.f32.gmra.mxu0 %v632
  %v677 = vpop.f32.mrf.mxu0
  %v678 = vadd.f32 0.0, %v677
  %679 = vmatmul.f32.gmra.mxu0 %v635
  %v680 = vpop.f32.mrf.mxu0
  %v681 = vadd.f32 0.0, %v680
  %682 = vdwg.mxu0
  %683 = vmatpush.msra.mxu0 0.0
  %684 = vmatpush.msra.mxu0 0.0
  %685 = vmatpush.msra.mxu0 0.0
  %686 = vmatpush.msra.mxu0 0.0
  %687 = vmatpush.msra.mxu0 0.0
  %688 = vmatpush.msra.mxu0 0.0
  %689 = vmatpush.msra.mxu0 0.0
  %690 = vmatpush.msra.mxu0 0.0
  %691 = vmatpush.msra.mxu0 0.0
  %692 = vmatpush.msra.mxu0 0.0
  %693 = vmatpush.msra.mxu0 0.0
  %694 = vmatpush.msra.mxu0 0.0
  %695 = vmatpush.msra.mxu0 0.0
  %696 = vmatpush.msra.mxu0 0.0
  %697 = vmatpush.msra.mxu0 0.0
  %698 = vmatpush.msra.mxu0 %v626
  %699 = vmatmul.f32.gmra.mxu0 %v632
  %v700 = vpop.f32.mrf.mxu0
  %v701 = vadd.f32 0.0, %v700
  %702 = vmatmul.f32.gmra.mxu0 %v635
  %v703 = vpop.f32.mrf.mxu0
  %v704 = vadd.f32 0.0, %v703
  %705 = vdwg.mxu0
  %706 = vmatpush.msra.mxu0 0.0
  %707 = vmatpush.msra.mxu0 0.0
  %708 = vmatpush.msra.mxu0 0.0
  %709 = vmatpush.msra.mxu0 0.0
  %710 = vmatpush.msra.mxu0 0.0
  %711 = vmatpush.msra.mxu0 0.0
  %712 = vmatpush.msra.mxu0 0.0
  %713 = vmatpush.msra.mxu0 0.0
  %714 = vmatpush.msra.mxu0 0.0
  %715 = vmatpush.msra.mxu0 0.0
  %716 = vmatpush.msra.mxu0 0.0
  %717 = vmatpush.msra.mxu0 0.0
  %718 = vmatpush.msra.mxu0 0.0
  %719 = vmatpush.msra.mxu0 0.0
  %720 = vmatpush.msra.mxu0 0.0
  %721 = vmatpush.msra.mxu0 %v627
  %722 = vmatmul.f32.gmra.mxu0 %v632
  %v723 = vpop.f32.mrf.mxu0
  %v724 = vadd.f32 0.0, %v723
  %725 = vmatmul.f32.gmra.mxu0 %v635
  %v726 = vpop.f32.mrf.mxu0
  %v727 = vadd.f32 0.0, %v726
  %728 = vdwg.mxu0
  %v729 = vld [vmem:[%s9] sm:$0xff]
  %v730 = vld [vmem:[%s9 + $0x8] sm:$0xff]
  %v731 = vld [vmem:[%s10] sm:$0xff]
  %v732 = vld [vmem:[%s10 + $0x8] sm:$0xff]
  %v733 = vadd.f32 %v655, %v678
  %v734 = vadd.f32 %v733, %v701
  %v735 = vadd.f32 %v734, %v724
  %736 = vadd.xlane.f32.xlu0 %v735
  %v737 = vpop.xlane.xlu0 %736
  %v738 = vadd.f32 %v658, %v681
  %v739 = vadd.f32 %v738, %v704
  %v740 = vadd.f32 %v739, %v727
  %741 = vadd.xlane.f32.xlu0 %v740
  %v742 = vpop.xlane.xlu0 %741
  %v743 = vmul.f32 %v655, %v655
  %v744 = vmul.f32 %v678, %v678
  %v745 = vmul.f32 %v701, %v701
  %v746 = vmul.f32 %v724, %v724
  %v747 = vmul.f32 %v658, %v658
  %v748 = vmul.f32 %v681, %v681
  %v749 = vmul.f32 %v704, %v704
  %v750 = vmul.f32 %v727, %v727
  %v751 = vadd.f32 %v743, %v744
  %v752 = vadd.f32 %v751, %v745
  %v753 = vadd.f32 %v752, %v746
  %754 = vadd.xlane.f32.xlu0 %v753
  %v755 = vpop.xlane.xlu0 %754
  %v756 = vadd.f32 %v747, %v748
  %v757 = vadd.f32 %v756, %v749
  %v758 = vadd.f32 %v757, %v750
  %759 = vadd.xlane.f32.xlu0 %v758
  %v760 = vpop.xlane.xlu0 %759
  %v761 = vmul.f32 %v737, 0.001953125
  %v762 = vmul.f32 %v742, 0.001953125
  %v763 = vmul.f32 %v755, 0.001953125
  %v764 = vmul.f32 %v760, 0.001953125
  %v765 = vmul.f32 %v761, %v761
  %v766 = vmul.f32 %v762, %v762
  %v767 = vsub.f32 %v763, %v765
  %v768 = vsub.f32 %v764, %v766
  %v769 = vmax.f32 %v767, 0.0
  %v770 = vmax.f32 %v768, 0.0
  %v771 = vadd.f32 %v769, 1e-05
  %v772 = vadd.f32 %v770, 1e-05
  %v773 = vrsqrt.pop %v771
  %v774 = vmul.f32 %v773, %v771
  %v775 = vmul.f32 %v774, %v773
  %v776 = vmul.f32 0.5, %v775
  %v777 = vsub.f32 1.5, %v776
  %v778 = vmul.f32 %v773, %v777
  %vm779 = vweird.f32 %v771
  %vm780 = vweird.f32 %v773
  %vm781 = vmor %vm779, %vm780
  %v782 = vsel %vm781, %v773, %v778
  %v783 = vrsqrt.pop %v772
  %v784 = vmul.f32 %v783, %v772
  %v785 = vmul.f32 %v784, %v783
  %v786 = vmul.f32 0.5, %v785
  %v787 = vsub.f32 1.5, %v786
  %v788 = vmul.f32 %v783, %v787
  %vm789 = vweird.f32 %v772
  %vm790 = vweird.f32 %v783
  %vm791 = vmor %vm789, %vm790
  %v792 = vsel %vm791, %v783, %v788
  %v793 = vmul.f32 %v729, %v782
  %v794 = vmul.f32 %v730, %v792
  %v795 = vmul.f32 %v761, %v793
  %v796 = vmul.f32 %v762, %v794
  %v797 = vsub.f32 %v731, %v795
  %v798 = vsub.f32 %v732, %v796
  %800 = vset.pattern.permute.xlu0 0
  %801 = vperm.xlu0 %800, %v793
  %v802 = vpop.permute.xlu0 %801
  %805 = vset.pattern.permute.xlu0 0
  %806 = vperm.xlu0 %805, %v794
  %v807 = vpop.permute.xlu0 %806
  %v809 = vmul.f32 %v655, %v802
  %v810 = vmul.f32 %v678, %v802
  %v811 = vmul.f32 %v701, %v802
  %v812 = vmul.f32 %v724, %v802
  %v813 = vmul.f32 %v658, %v807
  %v814 = vmul.f32 %v681, %v807
  %v815 = vmul.f32 %v704, %v807
  %v816 = vmul.f32 %v727, %v807
  %818 = vset.pattern.permute.xlu0 0
  %819 = vperm.xlu0 %818, %v797
  %v820 = vpop.permute.xlu0 %819
  %823 = vset.pattern.permute.xlu0 0
  %824 = vperm.xlu0 %823, %v798
  %v825 = vpop.permute.xlu0 %824
  %v827 = vadd.f32 %v809, %v820
  %v828 = vadd.f32 %v810, %v820
  %v829 = vadd.f32 %v811, %v820
  %v830 = vadd.f32 %v812, %v820
  %v831 = vadd.f32 %v813, %v825
  %v832 = vadd.f32 %v814, %v825
  %v833 = vadd.f32 %v815, %v825
  %v834 = vadd.f32 %v816, %v825
  %v835 = vadd.f32 %v827, %v38
  %v836 = vadd.f32 %v828, %v39
  %v837 = vadd.f32 %v829, %v43
  %v838 = vadd.f32 %v830, %v44
  %v839 = vadd.f32 %v831, %v40
  %v840 = vadd.f32 %v832, %v41
  %v841 = vadd.f32 %v833, %v45
  %v842 = vadd.f32 %v834, %v46
  %v843 = vmax.f32 %v835, 0.0
  %v844 = vmax.f32 %v836, 0.0
  %v845 = vmax.f32 %v837, 0.0
  %v846 = vmax.f32 %v838, 0.0
  %v847 = vmax.f32 %v839, 0.0
  %v848 = vmax.f32 %v840, 0.0
  %v849 = vmax.f32 %v841, 0.0
  %v850 = vmax.f32 %v842, 0.0
  %851 = vst [vmem:[%s11] sm:$0xff] %v843
  %852 = vst [vmem:[%s11 + $0x8] sm:$0xff] %v844
  %853 = vst [vmem:[%s11 + $0x10] sm:$0xff] %v847
  %854 = vst [vmem:[%s11 + $0x18] sm:$0xff] %v848
  %s855 = scalar_lea.vmem %s11, 32
  %856 = vst [vmem:[%s855] sm:$0xff] %v845
  %857 = vst [vmem:[%s855 + $0x8] sm:$0xff] %v846
  %858 = vst [vmem:[%s855 + $0x10] sm:$0xff] %v849
  %859 = vst [vmem:[%s855 + $0x18] sm:$0xff] %v850
  // Predicated region
  $region46: #{bottleneck_forward.1} parent=0 // pred_check
    _
  $region47: #{bottleneck_forward.1} parent=0 // pred_check_branch
    %861 = sbr.rel (0) target = $region49
  $region48: #{bottleneck_forward.1} parent=0 // pred_region
    _
  $region49: #{bottleneck_forward.1} parent=0 // pred_fallthru
    _
  // Predicated region
  $region50: #{bottleneck_forward.1} parent=0 // pred_check
    _
  $region51: #{bottleneck_forward.1} parent=0 // pred_check_branch
    %863 = sbr.rel (0) target = $region53
  $region52: #{bottleneck_forward.1} parent=0 // pred_region
    _
  $region53: #{bottleneck_forward.1} parent=0 // pred_fallthru
    _

</llo_original>
